<compile_context>
chip_gen: v6e
topology: v6e:2x2x1
jax: 0.10.0
libtpu: 0.0.40
codegen_flags: <defaults>
</compile_context>

<pallas_src>
import math

import jax
import jax.numpy as jnp
from jax.experimental import pallas as pl
from jax.experimental.pallas import tpu as pltpu


# ----------------------------------------------------------------- utilities
def _round_up(a, m):
    return ((a + m - 1) // m) * m


# ------------------------------------------------------------- fused kernel
def _edge_kernel(gn_ref, gb_ref, wn_ref, wb_ref, b_ref, o_ref):
    acc = jnp.dot(gn_ref[...], wn_ref[...], preferred_element_type=jnp.float32)
    acc = acc + jnp.dot(gb_ref[...], wb_ref[...], preferred_element_type=jnp.float32)
    o_ref[...] = (acc + b_ref[...]).astype(o_ref.dtype)


def pallas_edge_gemm(g_n, g_b, w_n, w_b, bias, *, tile_rows):
    """out = g_n @ w_n + g_b @ w_b + bias, tiled over rows.

    g_n, g_b: [R, K]; w_n, w_b: [K, O]; bias: [1, O]; R % tile_rows == 0.
    """
    R, K = g_n.shape
    _, O = w_n.shape
    assert R % tile_rows == 0 and tile_rows % 8 == 0
    grid = (R // tile_rows,)

    flops = 2 * 2 * R * K * O                               # two matmuls
    bytes_accessed = 4 * (2 * R * K + 2 * K * O + O + R * O)

    return pl.pallas_call(
        _edge_kernel,
        out_shape=jax.ShapeDtypeStruct((R, O), jnp.float32),
        grid_spec=pltpu.PrefetchScalarGridSpec(
            num_scalar_prefetch=0,
            grid=grid,
            in_specs=[pl.BlockSpec((tile_rows, K), lambda i: (i, 0)),
                      pl.BlockSpec((tile_rows, K), lambda i: (i, 0)),
                      pl.BlockSpec((K, O), lambda i: (0, 0)),
                      pl.BlockSpec((K, O), lambda i: (0, 0)),
                      pl.BlockSpec((1, O), lambda i: (0, 0))],
            out_specs=pl.BlockSpec((tile_rows, O), lambda i: (i, 0))),
        compiler_params=pltpu.CompilerParams(
            dimension_semantics=("parallel",)),
        cost_estimate=pl.CostEstimate(flops=flops, transcendentals=0,
                                      bytes_accessed=bytes_accessed),
    )(g_n, g_b, w_n, w_b, bias)


# ---------------------------------------------------------------- the module
class NeighborPointInteract:
    def __init__(self, in_dim, n_coord, out_dim, neighbor_pos, key,
                 tile_edges=16384):
        self.in_dim, self.n_coord, self.out_dim = in_dim, n_coord, out_dim
        self.neighbor_pos = neighbor_pos
        self.tile_edges = tile_edges
        self.d_node = n_coord + in_dim
        in_dim_xi = in_dim + (0 if neighbor_pos == 'relative' else n_coord)

        def init_linear(kw, kb, fan_in, fan_out):
            # deterministic U(-1/sqrt(fan_in), 1/sqrt(fan_in)), like nn.Linear.
            # Stored transposed relative to PyTorch: W is [in, out].
            bound = 1.0 / (fan_in ** 0.5)
            w = jax.random.uniform(kw, (fan_in, fan_out), jnp.float32, -bound, bound)
            b = jax.random.uniform(kb, (fan_out,), jnp.float32, -bound, bound)
            return w, b

        k1, k2, k3, k4 = jax.random.split(key, 4)
        self.w_xi, self.b_xi = init_linear(k1, k2, in_dim_xi, out_dim)
        self.w_xn, self.b_xn = init_linear(k3, k4, in_dim + n_coord, out_dim)

        # ---- fold node linear + edge linear + xi gather into two node-operand weights ----
        w_xn_pos = self.w_xn[:n_coord]          # rows acting on (pos[n] - pos[b])
        w_xn_feat = self.w_xn[n_coord:]         # rows acting on x[n]
        if neighbor_pos == 'relative':
            w_xi_pos = jnp.zeros((n_coord, out_dim), jnp.float32)
            w_xi_feat = self.w_xi
        else:
            w_xi_pos = self.w_xi[:n_coord]
            w_xi_feat = self.w_xi[n_coord:]
        # node_tab row layout: [pos | x]
        w_n = jnp.concatenate([w_xn_pos, w_xn_feat], axis=0)               # == w_xn
        w_b = jnp.concatenate([-w_xn_pos + w_xi_pos, w_xi_feat], axis=0)
        b_comb = self.b_xn + self.b_xi

        # ---- lane packing: make the output last dim an exact multiple of 128 ----
        if out_dim % 128 == 0:
            pack = 1
        else:
            lcm = out_dim * 128 // math.gcd(out_dim, 128)
            pack = lcm // out_dim
            if pack * out_dim > 512:
                pack = 1   # TODO(synk): masked partial stores for awkward out_dims
        self.pack = pack
        if pack > 1:
            eye = jnp.eye(pack, dtype=jnp.float32)
            w_n_bd = jnp.kron(eye, w_n)          # block-diagonal [pack*d_node, pack*out]
            w_b_bd = jnp.kron(eye, w_b)
            b_bd = jnp.tile(b_comb, pack)
        else:
            w_n_bd, w_b_bd, b_bd = w_n, w_b, b_comb
        self.w_n_bd = w_n_bd
        self.w_b_bd = w_b_bd
        self.b_bd = b_bd.reshape(1, -1)          # [1, pack*out]

    def __call__(self, pos, x, neighbors, neighbor_batch):
        E = neighbors.shape[0]
        pack = self.pack
        unit = 8 * pack                                   # block rows stay multiples of 8
        K = pack * self.d_node
        O = pack * self.out_dim

        # v7x-safe tile sizing: keep double-buffered blocks under ~24 MiB (fits the
        # default scoped VMEM on v5e/v6e/v7x without raising vmem_limit_bytes).
        bytes_per_packed_row = (2 * K + O) * 4 * 2
        max_rows = max(8, ((24 << 20) // bytes_per_packed_row) // 8 * 8)
        tile_rows = max(8, min(self.tile_edges // pack, max_rows) // 8 * 8)
        tile_e = tile_rows * pack
        tile_e = min(tile_e, _round_up(E, unit))          # don't over-pad tiny inputs
        tile_e = _round_up(tile_e, unit)
        E_pad = _round_up(E, tile_e)                      # no trailing edges dropped

        if E_pad != E:
            padn = E_pad - E
            zeros = jnp.zeros((padn,), neighbors.dtype)   # index 0 is always valid
            neighbors = jnp.concatenate([neighbors, zeros])
            neighbor_batch = jnp.concatenate([neighbor_batch, zeros])

        # XLA-side glue reduced to: one tiny node-table concat + two row gathers.
        # The contiguous reshape packs `pack` edges per kernel row (free, metadata only).
        node_tab = jnp.concatenate([pos, x], axis=1)                 # [N, d_node]
        g_n = node_tab[neighbors].reshape(E_pad // pack, K)
        g_b = node_tab[neighbor_batch].reshape(E_pad // pack, K)

        out = pallas_edge_gemm(g_n, g_b, self.w_n_bd, self.w_b_bd, self.b_bd,
                               tile_rows=tile_e // pack)             # [E_pad/pack, pack*out]
        out = out.reshape(E_pad, self.out_dim)                       # free contiguous reshape
        return out[:E] if E_pad != E else out


# -------------------------------------------------------------------- driver
def _reference(mod, pos, x, neighbors, neighbor_batch):
    feat = x if mod.neighbor_pos == 'relative' else jnp.concatenate([pos, x], 1)
    xi = feat @ mod.w_xi + mod.b_xi
    neigh_in = jnp.concatenate([pos[neighbors] - pos[neighbor_batch],
                                x[neighbors]], 1)
    x_neigh = neigh_in @ mod.w_xn + mod.b_xn
    return x_neigh + xi[neighbor_batch]


if __name__ == "__main__":
    key = jax.random.PRNGKey(0)
    k_pos, k_x, k_nb, k_nbb, k_p1, k_p2, k_p3 = jax.random.split(key, 7)

    N, E = 16, 37                      # E NOT a tile multiple -> exercises the padding path
    n_coord, in_dim = 3, 4

    pos = jax.random.normal(k_pos, (N, n_coord), jnp.float32)
    x = jax.random.normal(k_x, (N, in_dim), jnp.float32)
    neighbors = jax.random.randint(k_nb, (E,), 0, N, jnp.int32)
    neighbor_batch = jax.random.randint(k_nbb, (E,), 0, N, jnp.int32)

    configs = (('absolute', 32, k_p1),    # 128 % out_dim == 0  -> pack = 4
               ('relative', 32, k_p2),
               ('absolute', 48, k_p3))    # generalized lcm packing -> pack = 8
    for mode, out_dim, kp in configs:
        mod = NeighborPointInteract(in_dim, n_coord, out_dim,
                                    neighbor_pos=mode, key=kp)
        out = jax.block_until_ready(mod(pos, x, neighbors, neighbor_batch))
        ref = _reference(mod, pos, x, neighbors, neighbor_batch)
        assert out.shape == (E, out_dim)
        err = float(jnp.max(jnp.abs(out - ref)))
        assert jnp.allclose(out, ref, atol=2e-5, rtol=2e-5), (mode, out_dim, err)

    print("KERNEL_OK")
</pallas_src>

<mosaic_0001>
module attributes {stable_mosaic.version = 11 : i64} {
  func.func @_edge_kernel(%arg0: i32, %arg1: memref<16x28xf32, #tpu.memory_space<vmem>>, %arg2: memref<16x28xf32, #tpu.memory_space<vmem>>, %arg3: memref<28x128xf32, #tpu.memory_space<vmem>>, %arg4: memref<28x128xf32, #tpu.memory_space<vmem>>, %arg5: memref<1x128xf32, #tpu.memory_space<vmem>>, %arg6: memref<16x128xf32, #tpu.memory_space<vmem>>) attributes {dimension_semantics = [#tpu.dimension_semantics<parallel>], iteration_bounds = array<i64: 1>, scalar_prefetch = 0 : i64, scratch_operands = 0 : i64, tpu.core_type = #tpu.core_type<tc>, window_params = [{transform_indices = @transform_0, window_bounds = array<i64: 16, 28>}, {transform_indices = @transform_1, window_bounds = array<i64: 16, 28>}, {pipeline_mode = #tpu.pipeline_mode<synchronous>, transform_indices = @transform_2, window_bounds = array<i64: 28, 128>}, {pipeline_mode = #tpu.pipeline_mode<synchronous>, transform_indices = @transform_3, window_bounds = array<i64: 28, 128>}, {pipeline_mode = #tpu.pipeline_mode<synchronous>, transform_indices = @transform_4, window_bounds = array<i64: 1, 128>}, {transform_indices = @transform_5, window_bounds = array<i64: 16, 128>}]} {
    %c0 = arith.constant 0 : index
    %c0_0 = arith.constant 0 : index
    %0 = vector.load %arg1[%c0, %c0_0] : memref<16x28xf32, #tpu.memory_space<vmem>>, vector<16x28xf32>
    %c0_1 = arith.constant 0 : index
    %c0_2 = arith.constant 0 : index
    %1 = vector.load %arg3[%c0_1, %c0_2] : memref<28x128xf32, #tpu.memory_space<vmem>>, vector<28x128xf32>
    %cst = arith.constant dense<0.000000e+00> : vector<16x128xf32>
    %2 = tpu.matmul %0, %1, %cst {dimension_numbers = #tpu.dot_dimension_numbers<[1], [0], [0], [1], [0, 0, 1, 1], [], []>} : vector<16x28xf32>, vector<28x128xf32>, vector<16x128xf32> -> vector<16x128xf32>
    %c0_3 = arith.constant 0 : index
    %c0_4 = arith.constant 0 : index
    %3 = vector.load %arg2[%c0_3, %c0_4] : memref<16x28xf32, #tpu.memory_space<vmem>>, vector<16x28xf32>
    %c0_5 = arith.constant 0 : index
    %c0_6 = arith.constant 0 : index
    %4 = vector.load %arg4[%c0_5, %c0_6] : memref<28x128xf32, #tpu.memory_space<vmem>>, vector<28x128xf32>
    %cst_7 = arith.constant dense<0.000000e+00> : vector<16x128xf32>
    %5 = tpu.matmul %3, %4, %cst_7 {dimension_numbers = #tpu.dot_dimension_numbers<[1], [0], [0], [1], [0, 0, 1, 1], [], []>} : vector<16x28xf32>, vector<28x128xf32>, vector<16x128xf32> -> vector<16x128xf32>
    %6 = arith.addf %2, %5 : vector<16x128xf32>
    %c0_8 = arith.constant 0 : index
    %c0_9 = arith.constant 0 : index
    %7 = vector.load %arg5[%c0_8, %c0_9] : memref<1x128xf32, #tpu.memory_space<vmem>>, vector<1x128xf32>
    %8 = vector.broadcast %7 : vector<1x128xf32> to vector<16x128xf32>
    %9 = arith.addf %6, %8 : vector<16x128xf32>
    %c0_10 = arith.constant 0 : index
    %c0_11 = arith.constant 0 : index
    %10 = vector.load %arg6[%c0_10, %c0_11] : memref<16x128xf32, #tpu.memory_space<vmem>>, vector<16x128xf32>
    tpu.vector_store %arg6[%c0_10, %c0_11], %9 {strides = array<i32>} : memref<16x128xf32, #tpu.memory_space<vmem>>, vector<16x128xf32>,
    return
  }
  func.func @transform_0(%arg0: i32) -> (i32, i32) {
    %c0_i32 = arith.constant 0 : i32
    %c0_i32_0 = arith.constant 0 : i32
    return %arg0, %c0_i32 : i32, i32
  }
  func.func @transform_1(%arg0: i32) -> (i32, i32) {
    %c0_i32 = arith.constant 0 : i32
    %c0_i32_0 = arith.constant 0 : i32
    return %arg0, %c0_i32 : i32, i32
  }
  func.func @transform_2(%arg0: i32) -> (i32, i32) {
    %c0_i32 = arith.constant 0 : i32
    %c0_i32_0 = arith.constant 0 : i32
    %c0_i32_1 = arith.constant 0 : i32
    return %c0_i32, %c0_i32_0 : i32, i32
  }
  func.func @transform_3(%arg0: i32) -> (i32, i32) {
    %c0_i32 = arith.constant 0 : i32
    %c0_i32_0 = arith.constant 0 : i32
    %c0_i32_1 = arith.constant 0 : i32
    return %c0_i32, %c0_i32_0 : i32, i32
  }
  func.func @transform_4(%arg0: i32) -> (i32, i32) {
    %c0_i32 = arith.constant 0 : i32
    %c0_i32_0 = arith.constant 0 : i32
    %c0_i32_1 = arith.constant 0 : i32
    return %c0_i32, %c0_i32_0 : i32, i32
  }
  func.func @transform_5(%arg0: i32) -> (i32, i32) {
    %c0_i32 = arith.constant 0 : i32
    %c0_i32_0 = arith.constant 0 : i32
    return %arg0, %c0_i32 : i32, i32
  }
}

</mosaic_0001>

<llo_original>
// kernel: tpu_custom_call.1
$region0: #{tpu_custom_call.1}
  #allocation0 [shape = 'u32[]', space=smem, size = 0x4, offset = 0x4, fixed_abs, tag = 'smem constant byte address 0x4 - core index']
  #allocation1 [shape = 'u32[144,128]{1,0:T(1,128)}', space=vmem, size = 0x12000, scoped, tag = 'internal scratch']
  %s0 = inlined_call_operand.hbm [shape: f32[16,28], index: 0, kind: input, shape index: {}]
  %s1 = inlined_call_operand.hbm [shape: f32[16,28], index: 1, kind: input, shape index: {}]
  %s2 = inlined_call_operand.hbm [shape: f32[28,128], index: 2, kind: input, shape index: {}]
  %s3 = inlined_call_operand.hbm [shape: f32[28,128], index: 3, kind: input, shape index: {}]
  %s4 = inlined_call_operand.vmem [shape: f32[1,128], index: 4, kind: input, shape index: {}]
  %s5 = inlined_call_operand.hbm [shape: f32[16,128], index: 5, kind: output, shape index: {}]
  %s6 = sld [smem:[#allocation0]]
  $region46: #{tpu_custom_call.1} parent=0
    _
  %s8 = ssub.s32 1, %s6
  %s9 = scalar_select 0, %s8, %s6
  $region1: #{tpu_custom_call.1} parent=0
    #allocation2 [shape = 'u8[8192]{0}', space=vmem, size = 0x2000, scoped, tag = 'input window, operand 0, single buffered']
    #allocation3 [shape = 's32[1]{0}', space=sflag, size = 0x4, scoped, tag = 'scoped memory for tpu_custom_call.1']
    #allocation4 [shape = 's32[1]{0}', space=sflag, size = 0x4, scoped, tag = 'scoped memory for tpu_custom_call.1']
    #allocation5 [shape = 'u8[8192]{0}', space=vmem, size = 0x2000, scoped, tag = 'input window, operand 1, single buffered']
    #allocation6 [shape = 's32[1]{0}', space=sflag, size = 0x4, scoped, tag = 'scoped memory for tpu_custom_call.1']
    #allocation7 [shape = 'u8[16384]{0}', space=vmem, size = 0x4000, scoped, tag = 'input window, operand 2, single buffered']
    #allocation8 [shape = 'u8[16384]{0}', space=vmem, size = 0x4000, scoped, tag = 'input window, operand 3, single buffered']
    #allocation9 [shape = 's32[1]{0}', space=sflag, size = 0x4, scoped, tag = 'scoped memory for tpu_custom_call.1']
    #allocation10 [shape = 'u8[8192]{0}', space=vmem, size = 0x2000, scoped, tag = 'output window, operand 0, single buffered']
    %10 = vsyncpa [#allocation3], 0
    %11 = vsyncpa [#allocation6], 0
    %12 = vsyncpa [#allocation9], 0
    %13 = vsyncpa [#allocation4], 0
    // Predicated region
    $region2: #{tpu_custom_call.1} parent=1 // pred_check
      _
    $region3: #{tpu_custom_call.1} parent=1 // pred_check_branch
      %15 = sbr.rel (0) target = $region5
    $region4: #{tpu_custom_call.1} parent=1 // pred_region
      %s17 = ssub.s32 256, 256
      %18 = vsyncadd [#allocation3], %s17
      %s19 = sshll.u32 [#allocation2], 4
      %s20 = int_to_ptr.vmem [resolvable:$true] %s19
      %25 = dma.hbm_to_vmem [thread:$0]  %s0, 256, %s20, [#allocation3], 128, 128, 8
    $region5: #{tpu_custom_call.1} parent=1 // pred_fallthru
      _
    // Predicated region
    $region6: #{tpu_custom_call.1} parent=1 // pred_check
      _
    $region7: #{tpu_custom_call.1} parent=1 // pred_check_branch
      %27 = sbr.rel (0) target = $region9
    $region8: #{tpu_custom_call.1} parent=1 // pred_region
      %s29 = ssub.s32 256, 256
      %30 = vsyncadd [#allocation6], %s29
      %s31 = sshll.u32 [#allocation5], 4
      %s32 = int_to_ptr.vmem [resolvable:$true] %s31
      %37 = dma.hbm_to_vmem [thread:$0]  %s1, 256, %s32, [#allocation6], 128, 128, 8
    $region9: #{tpu_custom_call.1} parent=1 // pred_fallthru
      _
    // Predicated region
    $region10: #{tpu_custom_call.1} parent=1 // pred_check
      _
    $region11: #{tpu_custom_call.1} parent=1 // pred_check_branch
      %39 = sbr.rel (0) target = $region13
    $region12: #{tpu_custom_call.1} parent=1 // pred_region
      %s41 = ssub.s32 512, 512
      %42 = vsyncadd [#allocation6], %s41
      %s43 = sshll.u32 [#allocation7], 4
      %s44 = int_to_ptr.vmem [resolvable:$true] %s43
      %49 = dma.hbm_to_vmem [thread:$0]  %s2, 512, %s44, [#allocation6], 128, 128, 8
    $region13: #{tpu_custom_call.1} parent=1 // pred_fallthru
      _
    // Predicated region
    $region14: #{tpu_custom_call.1} parent=1 // pred_check
      _
    $region15: #{tpu_custom_call.1} parent=1 // pred_check_branch
      %51 = sbr.rel (0) target = $region17
    $region16: #{tpu_custom_call.1} parent=1 // pred_region
      %s53 = ssub.s32 512, 512
      %54 = vsyncadd [#allocation9], %s53
      %s55 = sshll.u32 [#allocation8], 4
      %s56 = int_to_ptr.vmem [resolvable:$true] %s55
      %61 = dma.hbm_to_vmem [thread:$0]  %s3, 512, %s56, [#allocation9], 128, 128, 8
    $region17: #{tpu_custom_call.1} parent=1 // pred_fallthru
      _
    // Predicated region
    $region18: #{tpu_custom_call.1} parent=1 // pred_check
      _
    $region19: #{tpu_custom_call.1} parent=1 // pred_check_branch
      %63 = sbr.rel (0) target = $region21
    $region20: #{tpu_custom_call.1} parent=1 // pred_region
      _
    $region21: #{tpu_custom_call.1} parent=1 // pred_fallthru
      _
    // Predicated region
    $region22: #{tpu_custom_call.1} parent=1 // pred_check
      _
    $region23: #{tpu_custom_call.1} parent=1 // pred_check_branch
      %65 = sbr.rel (0) target = $region25
    $region24: #{tpu_custom_call.1} parent=1 // pred_region
      %66 = dma.done [#allocation3], 256
    $region25: #{tpu_custom_call.1} parent=1 // pred_fallthru
      _
    // Predicated region
    $region26: #{tpu_custom_call.1} parent=1 // pred_check
      _
    $region27: #{tpu_custom_call.1} parent=1 // pred_check_branch
      %68 = sbr.rel (0) target = $region29
    $region28: #{tpu_custom_call.1} parent=1 // pred_region
      %69 = dma.done [#allocation6], 256
    $region29: #{tpu_custom_call.1} parent=1 // pred_fallthru
      _
    // Predicated region
    $region30: #{tpu_custom_call.1} parent=1 // pred_check
      _
    $region31: #{tpu_custom_call.1} parent=1 // pred_check_branch
      %71 = sbr.rel (0) target = $region33
    $region32: #{tpu_custom_call.1} parent=1 // pred_region
      %72 = dma.done [#allocation6], 512
    $region33: #{tpu_custom_call.1} parent=1 // pred_fallthru
      _
    // Predicated region
    $region34: #{tpu_custom_call.1} parent=1 // pred_check
      _
    $region35: #{tpu_custom_call.1} parent=1 // pred_check_branch
      %74 = sbr.rel (0) target = $region37
    $region36: #{tpu_custom_call.1} parent=1 // pred_region
      %75 = dma.done [#allocation9], 512
    $region37: #{tpu_custom_call.1} parent=1 // pred_fallthru
      _
    %v76 = vld [vmem:[#allocation2] sm:$0xff]
    %v77 = vld [vmem:[#allocation2 + $0x8] sm:$0xff]
    %v78 = vld [vmem:[#allocation7] sm:$0xff]
    %v79 = vld [vmem:[#allocation7 + $0x8] sm:$0xff]
    %v80 = vld [vmem:[#allocation7 + $0x10] sm:$0xff]
    %v81 = vld [vmem:[#allocation7 + $0x18] sm:$0xf]
    %v82 = vld [vmem:[#allocation5] sm:$0xff]
    %v83 = vld [vmem:[#allocation5 + $0x8] sm:$0xff]
    %v84 = vld [vmem:[#allocation8] sm:$0xff]
    %v85 = vld [vmem:[#allocation8 + $0x8] sm:$0xff]
    %v86 = vld [vmem:[#allocation8 + $0x10] sm:$0xff]
    %v87 = vld [vmem:[#allocation8 + $0x18] sm:$0xf]
    %vm88 = vcmask 228352
    %v90 = vsel %vm88, %v82, 0
    %v93 = vsel %vm88, %v83, 0
    %vm95 = vcmask 1043456
    %v97 = vsel %vm95, %v87, 0
    %99 = vmatprep.subr.mxu0 0.0
    %100 = vmatpush1.msra.mxu0 0.0
    %101 = vmatprep.subr.mxu0 0.0
    %102 = vmatpush1.msra.mxu0 0.0
    %103 = vmatprep.subr.mxu0 0.0
    %104 = vmatpush1.msra.mxu0 0.0
    %105 = vmatprep.subr.mxu0 0.0
    %106 = vmatpush1.msra.mxu0 0.0
    %107 = vmatprep.subr.mxu0 0.0
    %108 = vmatpush1.msra.mxu0 0.0
    %109 = vmatprep.subr.mxu0 0.0
    %110 = vmatpush1.msra.mxu0 0.0
    %111 = vmatprep.subr.mxu0 0.0
    %112 = vmatpush1.msra.mxu0 0.0
    %113 = vmatprep.subr.mxu0 0.0
    %114 = vmatpush1.msra.mxu0 0.0
    %115 = vmatprep.subr.mxu0 0.0
    %116 = vmatpush1.msra.mxu0 0.0
    %117 = vmatprep.subr.mxu0 0.0
    %118 = vmatpush1.msra.mxu0 0.0
    %119 = vmatprep.subr.mxu0 0.0
    %120 = vmatpush1.msra.mxu0 0.0
    %121 = vmatprep.subr.mxu0 0.0
    %122 = vmatpush1.msra.mxu0 0.0
    %123 = vmatprep.subr.mxu0 0.0
    %124 = vmatpush1.msra.mxu0 %v97
    %125 = vmatprep.subr.mxu0 0.0
    %126 = vmatpush1.msra.mxu0 %v86
    %127 = vmatprep.subr.mxu0 0.0
    %128 = vmatpush1.msra.mxu0 %v85
    %129 = vmatprep.subr.mxu0 0.0
    %130 = vmatpush1.msra.mxu0 %v84
    %131 = vmatprep.subr.mxu0 0.0
    %132 = vmatpush2.msra.mxu0 0.0
    %133 = vmatprep.subr.mxu0 0.0
    %134 = vmatpush2.msra.mxu0 0.0
    %135 = vmatprep.subr.mxu0 0.0
    %136 = vmatpush2.msra.mxu0 0.0
    %137 = vmatprep.subr.mxu0 0.0
    %138 = vmatpush2.msra.mxu0 0.0
    %139 = vmatprep.subr.mxu0 0.0
    %140 = vmatpush2.msra.mxu0 0.0
    %141 = vmatprep.subr.mxu0 0.0
    %142 = vmatpush2.msra.mxu0 0.0
    %143 = vmatprep.subr.mxu0 0.0
    %144 = vmatpush2.msra.mxu0 0.0
    %145 = vmatprep.subr.mxu0 0.0
    %146 = vmatpush2.msra.mxu0 0.0
    %147 = vmatprep.subr.mxu0 0.0
    %148 = vmatpush2.msra.mxu0 0.0
    %149 = vmatprep.subr.mxu0 0.0
    %150 = vmatpush2.msra.mxu0 0.0
    %151 = vmatprep.subr.mxu0 0.0
    %152 = vmatpush2.msra.mxu0 0.0
    %153 = vmatprep.subr.mxu0 0.0
    %154 = vmatpush2.msra.mxu0 0.0
    %155 = vmatprep.subr.mxu0 0.0
    %156 = vmatpush2.msra.mxu0 0.0
    %157 = vmatprep.subr.mxu0 0.0
    %158 = vmatpush2.msra.mxu0 0.0
    %159 = vmatprep.subr.mxu0 0.0
    %160 = vmatpush2.msra.mxu0 0.0
    %161 = vmatprep.subr.mxu0 0.0
    %162 = vmatpush2.msra.mxu0 0.0
    %163 = vmatprep.mubr.f32.mxu0 0.0
    %164 = vmatmul.mubr.f32.gmra.mxu0 %v90
    %v165 = vpop.f32.mrf.mxu0
    %v166 = vadd.f32 0.0, %v165
    %v167 = vpop.f32.mrf.mxu0
    %168 = vmatprep.mubr.f32.mxu0 0.0
    %169 = vmatmul.mubr.f32.gmra.mxu0 %v93
    %v170 = vpop.f32.mrf.mxu0
    %v171 = vadd.f32 0.0, %v170
    %v172 = vpop.f32.mrf.mxu0
    %173 = vdwg.mxu0
    %v175 = vsel %vm88, %v76, 0
    %v178 = vsel %vm88, %v77, 0
    %v181 = vsel %vm95, %v81, 0
    %183 = vmatprep.subr.mxu0 0.0
    %184 = vmatpush1.msra.mxu0 0.0
    %185 = vmatprep.subr.mxu0 0.0
    %186 = vmatpush1.msra.mxu0 0.0
    %187 = vmatprep.subr.mxu0 0.0
    %188 = vmatpush1.msra.mxu0 0.0
    %189 = vmatprep.subr.mxu0 0.0
    %190 = vmatpush1.msra.mxu0 0.0
    %191 = vmatprep.subr.mxu0 0.0
    %192 = vmatpush1.msra.mxu0 0.0
    %193 = vmatprep.subr.mxu0 0.0
    %194 = vmatpush1.msra.mxu0 0.0
    %195 = vmatprep.subr.mxu0 0.0
    %196 = vmatpush1.msra.mxu0 0.0
    %197 = vmatprep.subr.mxu0 0.0
    %198 = vmatpush1.msra.mxu0 0.0
    %199 = vmatprep.subr.mxu0 0.0
    %200 = vmatpush1.msra.mxu0 0.0
    %201 = vmatprep.subr.mxu0 0.0
    %202 = vmatpush1.msra.mxu0 0.0
    %203 = vmatprep.subr.mxu0 0.0
    %204 = vmatpush1.msra.mxu0 0.0
    %205 = vmatprep.subr.mxu0 0.0
    %206 = vmatpush1.msra.mxu0 0.0
    %207 = vmatprep.subr.mxu0 0.0
    %208 = vmatpush1.msra.mxu0 %v181
    %209 = vmatprep.subr.mxu0 0.0
    %210 = vmatpush1.msra.mxu0 %v80
    %211 = vmatprep.subr.mxu0 0.0
    %212 = vmatpush1.msra.mxu0 %v79
    %213 = vmatprep.subr.mxu0 0.0
    %214 = vmatpush1.msra.mxu0 %v78
    %215 = vmatprep.subr.mxu0 0.0
    %216 = vmatpush2.msra.mxu0 0.0
    %217 = vmatprep.subr.mxu0 0.0
    %218 = vmatpush2.msra.mxu0 0.0
    %219 = vmatprep.subr.mxu0 0.0
    %220 = vmatpush2.msra.mxu0 0.0
    %221 = vmatprep.subr.mxu0 0.0
    %222 = vmatpush2.msra.mxu0 0.0
    %223 = vmatprep.subr.mxu0 0.0
    %224 = vmatpush2.msra.mxu0 0.0
    %225 = vmatprep.subr.mxu0 0.0
    %226 = vmatpush2.msra.mxu0 0.0
    %227 = vmatprep.subr.mxu0 0.0
    %228 = vmatpush2.msra.mxu0 0.0
    %229 = vmatprep.subr.mxu0 0.0
    %230 = vmatpush2.msra.mxu0 0.0
    %231 = vmatprep.subr.mxu0 0.0
    %232 = vmatpush2.msra.mxu0 0.0
    %233 = vmatprep.subr.mxu0 0.0
    %234 = vmatpush2.msra.mxu0 0.0
    %235 = vmatprep.subr.mxu0 0.0
    %236 = vmatpush2.msra.mxu0 0.0
    %237 = vmatprep.subr.mxu0 0.0
    %238 = vmatpush2.msra.mxu0 0.0
    %239 = vmatprep.subr.mxu0 0.0
    %240 = vmatpush2.msra.mxu0 0.0
    %241 = vmatprep.subr.mxu0 0.0
    %242 = vmatpush2.msra.mxu0 0.0
    %243 = vmatprep.subr.mxu0 0.0
    %244 = vmatpush2.msra.mxu0 0.0
    %245 = vmatprep.subr.mxu0 0.0
    %246 = vmatpush2.msra.mxu0 0.0
    %247 = vmatprep.mubr.f32.mxu0 0.0
    %248 = vmatmul.mubr.f32.gmra.mxu0 %v175
    %v249 = vpop.f32.mrf.mxu0
    %v250 = vadd.f32 %v166, %v249
    %v251 = vpop.f32.mrf.mxu0
    %252 = vmatprep.mubr.f32.mxu0 0.0
    %253 = vmatmul.mubr.f32.gmra.mxu0 %v178
    %v254 = vpop.f32.mrf.mxu0
    %v255 = vadd.f32 %v171, %v254
    %v256 = vpop.f32.mrf.mxu0
    %257 = vdwg.mxu0
    %v258 = vld [vmem:[%s4] sm:$0x1]
    %v260 = vlaneseq
    %v261 = vshrl.u32 %v260, 7
    %v262 = vsub.s32 0, %v261
    %v263 = vrot.slane %v258, %v262
    %v265 = vadd.f32 %v250, %v263
    %v266 = vadd.f32 %v255, %v263
    %267 = vst [vmem:[#allocation10] sm:$0xff] %v265
    %268 = vst [vmem:[#allocation10 + $0x8] sm:$0xff] %v266
    // Predicated region
    $region38: #{tpu_custom_call.1} parent=1 // pred_check
      _
    $region39: #{tpu_custom_call.1} parent=1 // pred_check_branch
      %270 = sbr.rel (0) target = $region41
    $region40: #{tpu_custom_call.1} parent=1 // pred_region
      %s272 = ssub.s32 256, 256
      %273 = vsyncadd [#allocation4], %s272
      %s274 = sshll.u32 [#allocation10], 4
      %s275 = int_to_ptr.vmem [resolvable:$true] %s274
      %280 = dma.vmem_to_hbm [thread:$0]  %s275, 256, %s5, [#allocation4], 128, 128, 8
    $region41: #{tpu_custom_call.1} parent=1 // pred_fallthru
      _
    // Predicated region
    $region42: #{tpu_custom_call.1} parent=1 // pred_check
      _
    $region43: #{tpu_custom_call.1} parent=1 // pred_check_branch
      %282 = sbr.rel (0) target = $region45
    $region44: #{tpu_custom_call.1} parent=1 // pred_region
      %283 = dma.done [#allocation4], 256
    $region45: #{tpu_custom_call.1} parent=1 // pred_fallthru
      _
    %284 = vsyncpa [#allocation3], 1
    %285 = vsyncpa [#allocation6], 1
    %286 = vsyncpa [#allocation9], 1
    %287 = vsyncpa [#allocation4], 1

</llo_original>
